<compile_context>
chip_gen: v6e
topology: v6e:2x2x1
jax: 0.10.0
libtpu: 0.0.40
codegen_flags: <defaults>
</compile_context>

<pallas_src>
import jax
import jax.numpy as jnp
from jax.experimental import pallas as pl
from jax.experimental.pallas import tpu as pltpu


def _actor_critic_kernel(state_ref, action_ref,
                         w1_ref, b1_ref, w2_ref, b2_ref, w3_ref, b3_ref,
                         out_ref):
    x = state_ref[...]                                                  # [TB, S] f32

    # Layer 1: contract over the feature axis of both operands -> [2H, TB].
    # The MXU absorbs the state transpose; activations are batch-on-lane from here.
    h1 = jnp.tanh(
        jax.lax.dot_general(w1_ref[...], x,
                            dimension_numbers=(((1,), (1,)), ((), ())),
                            preferred_element_type=jnp.float32)
        + b1_ref[...])                                                  # [2H, TB]
    h2 = jnp.tanh(jnp.dot(w2_ref[...], h1,
                          preferred_element_type=jnp.float32) + b2_ref[...])   # [2H, TB]
    y3 = jnp.dot(w3_ref[...], h2,
                 preferred_element_type=jnp.float32) + b3_ref[...]             # [A+1, TB]

    A = w3_ref.shape[0] - 1
    logits = y3[:A, :]                                                  # [A, TB]
    value = y3[A:A + 1, :]                                              # [1, TB]

    # Numerically stable softmax over the (sublane) action axis.
    m = jnp.max(logits, axis=0, keepdims=True)
    shifted = logits - m
    z = jnp.sum(jnp.exp(shifted), axis=0, keepdims=True)
    log_probs = shifted - jnp.log(z)                                    # [A, TB]
    probs = jnp.exp(log_probs)                                          # EUP; no divide

    # log_prob(action) via one-hot over the small sublane axis.
    act = action_ref[...]                                               # [1, TB] int32
    rows = jax.lax.broadcasted_iota(jnp.int32, logits.shape, 0)
    onehot = (rows == act).astype(jnp.float32)                          # [A, TB]

    # Direct lane-dense row stores (no sublane concatenate).
    out_ref[0:1, :] = jnp.sum(onehot * log_probs, axis=0, keepdims=True)   # logp
    out_ref[1:2, :] = value                                                # value
    out_ref[2:3, :] = -jnp.sum(probs * log_probs, axis=0, keepdims=True)   # entropy


def _round_up(x, m):
    return (x + m - 1) // m * m


def fuse_params(p):
    """Fuse actor/critic layers into 3 block matmuls, transposed to [out, in]."""
    H = p["aw2"].shape[0]
    A = p["aw3"].shape[1]
    z_hh = jnp.zeros((H, H), jnp.float32)
    z_ha = jnp.zeros((H, A), jnp.float32)
    z_h1 = jnp.zeros((H, 1), jnp.float32)

    w1 = jnp.concatenate([p["aw1"], p["vw1"]], axis=1).T                # [2H, S]
    b1 = jnp.concatenate([p["ab1"], p["vb1"]], axis=1).T                # [2H, 1]
    w2 = jnp.block([[p["aw2"], z_hh], [z_hh, p["vw2"]]]).T              # [2H, 2H]
    b2 = jnp.concatenate([p["ab2"], p["vb2"]], axis=1).T                # [2H, 1]
    w3 = jnp.block([[p["aw3"], z_h1], [z_ha, p["vw3"]]]).T              # [A+1, 2H]
    b3 = jnp.concatenate([p["ab3"], p["vb3"]], axis=1).T                # [A+1, 1]
    return dict(w1=w1, b1=b1, w2=w2, b2=b2, w3=w3, b3=b3)


def actor_critic_evaluate(state, action, fused, *, tile_b=16384):
    """Pallas version of ActorCritic.evaluate(state, action) (use_CNN=False).

    state:  [B, state_dim] float32   (fed to the kernel as-is, no host relayout)
    action: [B] int32
    fused:  output of fuse_params()
    returns (action_logprobs [B], state_value [B], dist_entropy [B])
    """
    B, S = state.shape
    H2 = fused["w1"].shape[0]          # 2 * n_latent_var
    Ap1 = fused["w3"].shape[0]         # action_dim + 1
    A = Ap1 - 1

    # Tile selection:
    #   * multiple of 256 -> lane-aligned MXU/result tiles on v5e/v6e/v7x,
    #   * aim for >= 2 grid steps so v7x's 2 TensorCores both get work,
    #   * cap so the double-buffered state block stays ~4 MiB (safe even for
    #     v7x's 64 MiB physical / 32 MiB scoped VMEM),
    #   * tiny batches collapse to a single full-array block (no padding at all).
    vmem_cap = max(256, (4 * 1024 * 1024 // (S * 4)) // 256 * 256)
    half = _round_up(pl.cdiv(B, 2), 256)
    tile_b = max(256, min(tile_b, vmem_cap, half))
    if tile_b >= B:
        tile_b = B                     # single full-array block, no masked tail
    grid_b = pl.cdiv(B, tile_b)

    action_2d = action.astype(jnp.int32).reshape(1, B)   # metadata-only reshape

    def resident(shape):
        # Full-array block, constant index_map -> stays VMEM-resident across steps.
        return pl.BlockSpec(shape, lambda i: (0, 0))

    weight_bytes = 4 * (H2 * S + H2 + H2 * H2 + H2 + Ap1 * H2 + Ap1)
    cost = pl.CostEstimate(
        flops=2 * B * (H2 * S + H2 * H2 + Ap1 * H2) + 8 * B * (H2 + A),
        transcendentals=B * (2 * H2 + 2 * A + 1),
        bytes_accessed=4 * (B * S + B + 3 * B) + weight_bytes,
    )

    out = pl.pallas_call(
        _actor_critic_kernel,
        out_shape=jax.ShapeDtypeStruct((3, B), jnp.float32),
        grid=(grid_b,),
        in_specs=[
            pl.BlockSpec((tile_b, S), lambda i: (i, 0)),     # state [B,S], contiguous rows
            pl.BlockSpec((1, tile_b), lambda i: (0, i)),     # action [1,B]
            resident(fused["w1"].shape), resident(fused["b1"].shape),
            resident(fused["w2"].shape), resident(fused["b2"].shape),
            resident(fused["w3"].shape), resident(fused["b3"].shape),
        ],
        out_specs=pl.BlockSpec((3, tile_b), lambda i: (0, i)),
        compiler_params=pltpu.CompilerParams(
            dimension_semantics=("parallel",)),
        cost_estimate=cost,
    )(state, action_2d,
      fused["w1"], fused["b1"], fused["w2"], fused["b2"],
      fused["w3"], fused["b3"])

    # torch.squeeze(state_value) and Categorical return per-sample scalars.
    return out[0], out[1], out[2]


def init_params(key, state_dim, action_dim, n_latent_var):
    """Deterministic synthetic parameters (same shapes as the nn.Linear layers),
    stored as [in, out] so y = x @ W + b mirrors PyTorch's x @ W.T + b."""
    ks = jax.random.split(key, 12)

    def lin(kw, kb, fan_in, fan_out):
        bound = 1.0 / jnp.sqrt(fan_in)
        w = jax.random.uniform(kw, (fan_in, fan_out), jnp.float32, -bound, bound)
        b = jax.random.uniform(kb, (1, fan_out), jnp.float32, -bound, bound)
        return w, b

    aw1, ab1 = lin(ks[0], ks[1], state_dim, n_latent_var)
    aw2, ab2 = lin(ks[2], ks[3], n_latent_var, n_latent_var)
    aw3, ab3 = lin(ks[4], ks[5], n_latent_var, action_dim)
    vw1, vb1 = lin(ks[6], ks[7], state_dim, n_latent_var)
    vw2, vb2 = lin(ks[8], ks[9], n_latent_var, n_latent_var)
    vw3, vb3 = lin(ks[10], ks[11], n_latent_var, 1)
    return dict(aw1=aw1, ab1=ab1, aw2=aw2, ab2=ab2, aw3=aw3, ab3=ab3,
                vw1=vw1, vb1=vb1, vw2=vw2, vb2=vb2, vw3=vw3, vb3=vb3)


def reference_evaluate(state, action, p):
    """Pure-JAX reference mirroring the PyTorch forward semantics."""
    h = jnp.tanh(state @ p["aw1"] + p["ab1"])
    h = jnp.tanh(h @ p["aw2"] + p["ab2"])
    logits = h @ p["aw3"] + p["ab3"]
    probs = jax.nn.softmax(logits, axis=-1)
    log_probs = jnp.log(probs)
    logp = jnp.take_along_axis(log_probs, action.reshape(-1, 1), axis=-1)[:, 0]
    ent = -jnp.sum(probs * log_probs, axis=-1)
    g = jnp.tanh(state @ p["vw1"] + p["vb1"])
    g = jnp.tanh(g @ p["vw2"] + p["vb2"])
    value = (g @ p["vw3"] + p["vb3"])[:, 0]
    return logp, value, ent


if __name__ == "__main__":
    # Small shapes consistent with the module's MLP path.
    batch, state_dim, action_dim, n_latent_var = 8, 16, 4, 32

    key = jax.random.PRNGKey(0)
    k_state, k_act, k_params = jax.random.split(key, 3)

    state = jax.random.normal(k_state, (batch, state_dim), jnp.float32)
    action = jax.random.randint(k_act, (batch,), 0, action_dim, jnp.int32)
    params = init_params(k_params, state_dim, action_dim, n_latent_var)
    fused = fuse_params(params)

    logp, value, ent = actor_critic_evaluate(state, action, fused)
    jax.block_until_ready((logp, value, ent))

    r_logp, r_value, r_ent = reference_evaluate(state, action, params)
    assert jnp.allclose(logp, r_logp, atol=1e-4), "logprob mismatch"
    assert jnp.allclose(value, r_value, atol=1e-4), "value mismatch"
    assert jnp.allclose(ent, r_ent, atol=1e-4), "entropy mismatch"

    print("KERNEL_OK")
</pallas_src>

<mosaic_0001>
module attributes {stable_mosaic.version = 11 : i64} {
  func.func @_actor_critic_kernel(%arg0: i32, %arg1: memref<8x16xf32, #tpu.memory_space<vmem>>, %arg2: memref<1x8xi32, #tpu.memory_space<vmem>>, %arg3: memref<64x16xf32, #tpu.memory_space<vmem>>, %arg4: memref<64x1xf32, #tpu.memory_space<vmem>>, %arg5: memref<64x64xf32, #tpu.memory_space<vmem>>, %arg6: memref<64x1xf32, #tpu.memory_space<vmem>>, %arg7: memref<5x64xf32, #tpu.memory_space<vmem>>, %arg8: memref<5x1xf32, #tpu.memory_space<vmem>>, %arg9: memref<3x8xf32, #tpu.memory_space<vmem>>) attributes {dimension_semantics = [#tpu.dimension_semantics<parallel>], iteration_bounds = array<i64: 1>, scalar_prefetch = 0 : i64, scratch_operands = 0 : i64, tpu.core_type = #tpu.core_type<tc>, window_params = [{transform_indices = @transform_0, window_bounds = array<i64: 8, 16>}, {transform_indices = @transform_1, window_bounds = array<i64: 1, 8>}, {pipeline_mode = #tpu.pipeline_mode<synchronous>, transform_indices = @transform_2, window_bounds = array<i64: 64, 16>}, {pipeline_mode = #tpu.pipeline_mode<synchronous>, transform_indices = @transform_3, window_bounds = array<i64: 64, 1>}, {pipeline_mode = #tpu.pipeline_mode<synchronous>, transform_indices = @transform_4, window_bounds = array<i64: 64, 64>}, {pipeline_mode = #tpu.pipeline_mode<synchronous>, transform_indices = @transform_5, window_bounds = array<i64: 64, 1>}, {pipeline_mode = #tpu.pipeline_mode<synchronous>, transform_indices = @transform_6, window_bounds = array<i64: 5, 64>}, {pipeline_mode = #tpu.pipeline_mode<synchronous>, transform_indices = @transform_7, window_bounds = array<i64: 5, 1>}, {transform_indices = @transform_8, window_bounds = array<i64: 3, 8>}]} {
    %c0 = arith.constant 0 : index
    %c0_0 = arith.constant 0 : index
    %0 = vector.load %arg1[%c0, %c0_0] : memref<8x16xf32, #tpu.memory_space<vmem>>, vector<8x16xf32>
    %c0_1 = arith.constant 0 : index
    %c0_2 = arith.constant 0 : index
    %1 = vector.load %arg3[%c0_1, %c0_2] : memref<64x16xf32, #tpu.memory_space<vmem>>, vector<64x16xf32>
    %cst = arith.constant dense<0.000000e+00> : vector<64x8xf32>
    %2 = tpu.matmul %1, %0, %cst {dimension_numbers = #tpu.dot_dimension_numbers<[1], [1], [0], [0], [0, 0, 1, 0], [], []>} : vector<64x16xf32>, vector<8x16xf32>, vector<64x8xf32> -> vector<64x8xf32>
    %c0_3 = arith.constant 0 : index
    %c0_4 = arith.constant 0 : index
    %3 = vector.load %arg4[%c0_3, %c0_4] : memref<64x1xf32, #tpu.memory_space<vmem>>, vector<64x1xf32>
    %4 = vector.broadcast %3 : vector<64x1xf32> to vector<64x8xf32>
    %5 = arith.addf %2, %4 : vector<64x8xf32>
    %6 = math.tanh %5 : vector<64x8xf32>
    %c0_5 = arith.constant 0 : index
    %c0_6 = arith.constant 0 : index
    %7 = vector.load %arg5[%c0_5, %c0_6] : memref<64x64xf32, #tpu.memory_space<vmem>>, vector<64x64xf32>
    %cst_7 = arith.constant dense<0.000000e+00> : vector<64x8xf32>
    %8 = tpu.matmul %7, %6, %cst_7 {dimension_numbers = #tpu.dot_dimension_numbers<[1], [0], [0], [1], [0, 0, 1, 1], [], []>} : vector<64x64xf32>, vector<64x8xf32>, vector<64x8xf32> -> vector<64x8xf32>
    %c0_8 = arith.constant 0 : index
    %c0_9 = arith.constant 0 : index
    %9 = vector.load %arg6[%c0_8, %c0_9] : memref<64x1xf32, #tpu.memory_space<vmem>>, vector<64x1xf32>
    %10 = vector.broadcast %9 : vector<64x1xf32> to vector<64x8xf32>
    %11 = arith.addf %8, %10 : vector<64x8xf32>
    %12 = math.tanh %11 : vector<64x8xf32>
    %c0_10 = arith.constant 0 : index
    %c0_11 = arith.constant 0 : index
    %13 = vector.load %arg7[%c0_10, %c0_11] : memref<5x64xf32, #tpu.memory_space<vmem>>, vector<5x64xf32>
    %cst_12 = arith.constant dense<0.000000e+00> : vector<5x8xf32>
    %14 = tpu.matmul %13, %12, %cst_12 {dimension_numbers = #tpu.dot_dimension_numbers<[1], [0], [0], [1], [0, 0, 1, 1], [], []>} : vector<5x64xf32>, vector<64x8xf32>, vector<5x8xf32> -> vector<5x8xf32>
    %c0_13 = arith.constant 0 : index
    %c0_14 = arith.constant 0 : index
    %15 = vector.load %arg8[%c0_13, %c0_14] : memref<5x1xf32, #tpu.memory_space<vmem>>, vector<5x1xf32>
    %16 = vector.broadcast %15 : vector<5x1xf32> to vector<5x8xf32>
    %17 = arith.addf %14, %16 : vector<5x8xf32>
    %18 = vector.extract_strided_slice %17 {offsets = [0, 0], sizes = [4, 8], strides = [1, 1]} : vector<5x8xf32> to vector<4x8xf32>
    %19 = vector.extract_strided_slice %17 {offsets = [4, 0], sizes = [1, 8], strides = [1, 1]} : vector<5x8xf32> to vector<1x8xf32>
    %cst_15 = arith.constant dense<0xFF800000> : vector<8xf32>
    %20 = vector.multi_reduction <maximumf>, %18, %cst_15 [0] : vector<4x8xf32> to vector<8xf32>
    %21 = vector.shape_cast %20 : vector<8xf32> to vector<1x8xf32>
    %22 = vector.broadcast %21 : vector<1x8xf32> to vector<4x8xf32>
    %23 = arith.subf %18, %22 : vector<4x8xf32>
    %24 = math.exp %23 : vector<4x8xf32>
    %cst_16 = arith.constant dense<0.000000e+00> : vector<8xf32>
    %25 = vector.multi_reduction <add>, %24, %cst_16 [0] : vector<4x8xf32> to vector<8xf32>
    %26 = vector.shape_cast %25 : vector<8xf32> to vector<1x8xf32>
    %27 = math.log %26 : vector<1x8xf32>
    %28 = vector.broadcast %27 : vector<1x8xf32> to vector<4x8xf32>
    %29 = arith.subf %23, %28 : vector<4x8xf32>
    %30 = math.exp %29 : vector<4x8xf32>
    %c0_17 = arith.constant 0 : index
    %c0_18 = arith.constant 0 : index
    %31 = vector.load %arg2[%c0_17, %c0_18] : memref<1x8xi32, #tpu.memory_space<vmem>>, vector<1x8xi32>
    %32 = tpu.iota {dimensions = array<i32: 0>} : vector<4x8xi32>
    %33 = vector.broadcast %31 : vector<1x8xi32> to vector<4x8xi32>
    %34 = arith.cmpi eq, %32, %33 : vector<4x8xi32>
    %35 = arith.extui %34 : vector<4x8xi1> to vector<4x8xi32>
    %36 = arith.sitofp %35 : vector<4x8xi32> to vector<4x8xf32>
    %37 = arith.mulf %36, %29 : vector<4x8xf32>
    %cst_19 = arith.constant dense<0.000000e+00> : vector<8xf32>
    %38 = vector.multi_reduction <add>, %37, %cst_19 [0] : vector<4x8xf32> to vector<8xf32>
    %39 = vector.shape_cast %38 : vector<8xf32> to vector<1x8xf32>
    %c0_20 = arith.constant 0 : index
    %c0_21 = arith.constant 0 : index
    %40 = vector.load %arg9[%c0_20, %c0_21] : memref<3x8xf32, #tpu.memory_space<vmem>>, vector<1x8xf32>
    tpu.vector_store %arg9[%c0_20, %c0_21], %39 {strides = array<i32>} : memref<3x8xf32, #tpu.memory_space<vmem>>, vector<1x8xf32>,
    %c1 = arith.constant 1 : index
    %c0_22 = arith.constant 0 : index
    %41 = vector.load %arg9[%c1, %c0_22] : memref<3x8xf32, #tpu.memory_space<vmem>>, vector<1x8xf32>
    tpu.vector_store %arg9[%c1, %c0_22], %19 {strides = array<i32>} : memref<3x8xf32, #tpu.memory_space<vmem>>, vector<1x8xf32>,
    %42 = arith.mulf %30, %29 : vector<4x8xf32>
    %cst_23 = arith.constant dense<0.000000e+00> : vector<8xf32>
    %43 = vector.multi_reduction <add>, %42, %cst_23 [0] : vector<4x8xf32> to vector<8xf32>
    %44 = vector.shape_cast %43 : vector<8xf32> to vector<1x8xf32>
    %cst_24 = arith.constant 0.000000e+00 : f32
    %45 = vector.broadcast %cst_24 : f32 to vector<1x8xf32>
    %46 = arith.subf %45, %44 : vector<1x8xf32>
    %c2 = arith.constant 2 : index
    %c0_25 = arith.constant 0 : index
    %47 = vector.load %arg9[%c2, %c0_25] : memref<3x8xf32, #tpu.memory_space<vmem>>, vector<1x8xf32>
    tpu.vector_store %arg9[%c2, %c0_25], %46 {strides = array<i32>} : memref<3x8xf32, #tpu.memory_space<vmem>>, vector<1x8xf32>,
    return
  }
  func.func @transform_0(%arg0: i32) -> (i32, i32) {
    %c0_i32 = arith.constant 0 : i32
    %c0_i32_0 = arith.constant 0 : i32
    return %arg0, %c0_i32 : i32, i32
  }
  func.func @transform_1(%arg0: i32) -> (i32, i32) {
    %c0_i32 = arith.constant 0 : i32
    %c0_i32_0 = arith.constant 0 : i32
    return %c0_i32, %arg0 : i32, i32
  }
  func.func @transform_2(%arg0: i32) -> (i32, i32) {
    %c0_i32 = arith.constant 0 : i32
    %c0_i32_0 = arith.constant 0 : i32
    %c0_i32_1 = arith.constant 0 : i32
    return %c0_i32, %c0_i32_0 : i32, i32
  }
  func.func @transform_3(%arg0: i32) -> (i32, i32) {
    %c0_i32 = arith.constant 0 : i32
    %c0_i32_0 = arith.constant 0 : i32
    %c0_i32_1 = arith.constant 0 : i32
    return %c0_i32, %c0_i32_0 : i32, i32
  }
  func.func @transform_4(%arg0: i32) -> (i32, i32) {
    %c0_i32 = arith.constant 0 : i32
    %c0_i32_0 = arith.constant 0 : i32
    %c0_i32_1 = arith.constant 0 : i32
    return %c0_i32, %c0_i32_0 : i32, i32
  }
  func.func @transform_5(%arg0: i32) -> (i32, i32) {
    %c0_i32 = arith.constant 0 : i32
    %c0_i32_0 = arith.constant 0 : i32
    %c0_i32_1 = arith.constant 0 : i32
    return %c0_i32, %c0_i32_0 : i32, i32
  }
  func.func @transform_6(%arg0: i32) -> (i32, i32) {
    %c0_i32 = arith.constant 0 : i32
    %c0_i32_0 = arith.constant 0 : i32
    %c0_i32_1 = arith.constant 0 : i32
    return %c0_i32, %c0_i32_0 : i32, i32
  }
  func.func @transform_7(%arg0: i32) -> (i32, i32) {
    %c0_i32 = arith.constant 0 : i32
    %c0_i32_0 = arith.constant 0 : i32
    %c0_i32_1 = arith.constant 0 : i32
    return %c0_i32, %c0_i32_0 : i32, i32
  }
  func.func @transform_8(%arg0: i32) -> (i32, i32) {
    %c0_i32 = arith.constant 0 : i32
    %c0_i32_0 = arith.constant 0 : i32
    return %c0_i32, %arg0 : i32, i32
  }
}

</mosaic_0001>

<llo_original>
// kernel: tpu_custom_call.1
$region0: #{tpu_custom_call.1}
  #allocation0 [shape = 'u32[]', space=smem, size = 0x4, offset = 0x4, fixed_abs, tag = 'smem constant byte address 0x4 - core index']
  #allocation1 [shape = 'u32[144,128]{1,0:T(1,128)}', space=vmem, size = 0x12000, scoped, tag = 'internal scratch']
  %s0 = inlined_call_operand.vmem [shape: f32[8,16], index: 0, kind: input, shape index: {}]
  %s1 = inlined_call_operand.vmem [shape: s32[1,8], index: 1, kind: input, shape index: {}]
  %s2 = inlined_call_operand.vmem [shape: f32[64,16], index: 2, kind: input, shape index: {}]
  %s3 = inlined_call_operand.vmem [shape: f32[64,1], index: 3, kind: input, shape index: {}]
  %s4 = inlined_call_operand.vmem [shape: f32[64,64], index: 4, kind: input, shape index: {}]
  %s5 = inlined_call_operand.vmem [shape: f32[64,1], index: 5, kind: input, shape index: {}]
  %s6 = inlined_call_operand.vmem [shape: f32[5,64], index: 6, kind: input, shape index: {}]
  %s7 = inlined_call_operand.vmem [shape: f32[5,1], index: 7, kind: input, shape index: {}]
  %s8 = inlined_call_operand.hbm [shape: f32[3,8], index: 8, kind: output, shape index: {}]
  %s9 = sld [smem:[#allocation0]]
  $region42: #{tpu_custom_call.1} parent=0
    _
  %s11 = ssub.s32 1, %s9
  %s12 = scalar_select 0, %s11, %s9
  $region1: #{tpu_custom_call.1} parent=0
    #allocation2 [shape = 'u8[2048]{0}', space=vmem, size = 0x800, scoped, tag = 'output window, operand 0, single buffered']
    #allocation3 [shape = 's32[1]{0}', space=sflag, size = 0x4, scoped, tag = 'scoped memory for tpu_custom_call.1']
    %13 = vsyncpa [#allocation3], 0
    // Predicated region
    $region2: #{tpu_custom_call.1} parent=1 // pred_check
      _
    $region3: #{tpu_custom_call.1} parent=1 // pred_check_branch
      %15 = sbr.rel (0) target = $region5
    $region4: #{tpu_custom_call.1} parent=1 // pred_region
      _
    $region5: #{tpu_custom_call.1} parent=1 // pred_fallthru
      _
    // Predicated region
    $region6: #{tpu_custom_call.1} parent=1 // pred_check
      _
    $region7: #{tpu_custom_call.1} parent=1 // pred_check_branch
      %17 = sbr.rel (0) target = $region9
    $region8: #{tpu_custom_call.1} parent=1 // pred_region
      _
    $region9: #{tpu_custom_call.1} parent=1 // pred_fallthru
      _
    // Predicated region
    $region10: #{tpu_custom_call.1} parent=1 // pred_check
      _
    $region11: #{tpu_custom_call.1} parent=1 // pred_check_branch
      %19 = sbr.rel (0) target = $region13
    $region12: #{tpu_custom_call.1} parent=1 // pred_region
      _
    $region13: #{tpu_custom_call.1} parent=1 // pred_fallthru
      _
    // Predicated region
    $region14: #{tpu_custom_call.1} parent=1 // pred_check
      _
    $region15: #{tpu_custom_call.1} parent=1 // pred_check_branch
      %21 = sbr.rel (0) target = $region17
    $region16: #{tpu_custom_call.1} parent=1 // pred_region
      _
    $region17: #{tpu_custom_call.1} parent=1 // pred_fallthru
      _
    // Predicated region
    $region18: #{tpu_custom_call.1} parent=1 // pred_check
      _
    $region19: #{tpu_custom_call.1} parent=1 // pred_check_branch
      %23 = sbr.rel (0) target = $region21
    $region20: #{tpu_custom_call.1} parent=1 // pred_region
      _
    $region21: #{tpu_custom_call.1} parent=1 // pred_fallthru
      _
    // Predicated region
    $region22: #{tpu_custom_call.1} parent=1 // pred_check
      _
    $region23: #{tpu_custom_call.1} parent=1 // pred_check_branch
      %25 = sbr.rel (0) target = $region25
    $region24: #{tpu_custom_call.1} parent=1 // pred_region
      _
    $region25: #{tpu_custom_call.1} parent=1 // pred_fallthru
      _
    // Predicated region
    $region26: #{tpu_custom_call.1} parent=1 // pred_check
      _
    $region27: #{tpu_custom_call.1} parent=1 // pred_check_branch
      %27 = sbr.rel (0) target = $region29
    $region28: #{tpu_custom_call.1} parent=1 // pred_region
      _
    $region29: #{tpu_custom_call.1} parent=1 // pred_fallthru
      _
    // Predicated region
    $region30: #{tpu_custom_call.1} parent=1 // pred_check
      _
    $region31: #{tpu_custom_call.1} parent=1 // pred_check_branch
      %29 = sbr.rel (0) target = $region33
    $region32: #{tpu_custom_call.1} parent=1 // pred_region
      _
    $region33: #{tpu_custom_call.1} parent=1 // pred_fallthru
      _
    %v30 = vld [vmem:[%s0] sm:$0xff]
    %v31 = vld [vmem:[%s2] sm:$0xff]
    %v32 = vld [vmem:[%s2 + $0x8] sm:$0xff]
    %v33 = vld [vmem:[%s2 + $0x10] sm:$0xff]
    %v34 = vld [vmem:[%s2 + $0x18] sm:$0xff]
    %v35 = vld [vmem:[%s2 + $0x20] sm:$0xff]
    %v36 = vld [vmem:[%s2 + $0x28] sm:$0xff]
    %v37 = vld [vmem:[%s2 + $0x30] sm:$0xff]
    %v38 = vld [vmem:[%s2 + $0x38] sm:$0xff]
    %v39 = vld [vmem:[%s3] sm:$0xff]
    %v40 = vld [vmem:[%s3 + $0x8] sm:$0xff]
    %v41 = vld [vmem:[%s3 + $0x10] sm:$0xff]
    %v42 = vld [vmem:[%s3 + $0x18] sm:$0xff]
    %v43 = vld [vmem:[%s3 + $0x20] sm:$0xff]
    %v44 = vld [vmem:[%s3 + $0x28] sm:$0xff]
    %v45 = vld [vmem:[%s3 + $0x30] sm:$0xff]
    %v46 = vld [vmem:[%s3 + $0x38] sm:$0xff]
    %48 = vset.pattern.permute.xlu0 0
    %49 = vperm.xlu0 %48, %v39
    %v50 = vpop.permute.xlu0 %49
    %53 = vset.pattern.permute.xlu0 0
    %54 = vperm.xlu0 %53, %v40
    %v55 = vpop.permute.xlu0 %54
    %58 = vset.pattern.permute.xlu0 0
    %59 = vperm.xlu0 %58, %v41
    %v60 = vpop.permute.xlu0 %59
    %63 = vset.pattern.permute.xlu0 0
    %64 = vperm.xlu0 %63, %v42
    %v65 = vpop.permute.xlu0 %64
    %68 = vset.pattern.permute.xlu0 0
    %69 = vperm.xlu0 %68, %v43
    %v70 = vpop.permute.xlu0 %69
    %73 = vset.pattern.permute.xlu0 0
    %74 = vperm.xlu0 %73, %v44
    %v75 = vpop.permute.xlu0 %74
    %78 = vset.pattern.permute.xlu0 0
    %79 = vperm.xlu0 %78, %v45
    %v80 = vpop.permute.xlu0 %79
    %83 = vset.pattern.permute.xlu0 0
    %84 = vperm.xlu0 %83, %v46
    %v85 = vpop.permute.xlu0 %84
    %vm87 = vcmask 130048
    %v89 = vsel %vm87, %v31, 0
    %v92 = vsel %vm87, %v32, 0
    %v95 = vsel %vm87, %v33, 0
    %v98 = vsel %vm87, %v34, 0
    %v101 = vsel %vm87, %v35, 0
    %v104 = vsel %vm87, %v36, 0
    %v107 = vsel %vm87, %v37, 0
    %v110 = vsel %vm87, %v38, 0
    %v113 = vsel %vm87, %v30, 0
    %115 = vmatprep.subr.mxu0 0.0
    %116 = vmatpush1.xpose.msra.mxu0 0.0
    %117 = vmatprep.subr.mxu0 0.0
    %118 = vmatpush1.xpose.msra.mxu0 0.0
    %119 = vmatprep.subr.mxu0 0.0
    %120 = vmatpush1.xpose.msra.mxu0 0.0
    %121 = vmatprep.subr.mxu0 0.0
    %122 = vmatpush1.xpose.msra.mxu0 0.0
    %123 = vmatprep.subr.mxu0 0.0
    %124 = vmatpush1.xpose.msra.mxu0 0.0
    %125 = vmatprep.subr.mxu0 0.0
    %126 = vmatpush1.xpose.msra.mxu0 0.0
    %127 = vmatprep.subr.mxu0 0.0
    %128 = vmatpush1.xpose.msra.mxu0 0.0
    %129 = vmatprep.subr.mxu0 0.0
    %130 = vmatpush1.xpose.msra.mxu0 0.0
    %131 = vmatprep.subr.mxu0 0.0
    %132 = vmatpush1.xpose.msra.mxu0 0.0
    %133 = vmatprep.subr.mxu0 0.0
    %134 = vmatpush1.xpose.msra.mxu0 0.0
    %135 = vmatprep.subr.mxu0 0.0
    %136 = vmatpush1.xpose.msra.mxu0 0.0
    %137 = vmatprep.subr.mxu0 0.0
    %138 = vmatpush1.xpose.msra.mxu0 0.0
    %139 = vmatprep.subr.mxu0 0.0
    %140 = vmatpush1.xpose.msra.mxu0 0.0
    %141 = vmatprep.subr.mxu0 0.0
    %142 = vmatpush1.xpose.msra.mxu0 0.0
    %143 = vmatprep.subr.mxu0 0.0
    %144 = vmatpush1.xpose.msra.mxu0 0.0
    %145 = vmatprep.subr.mxu0 0.0
    %146 = vmatpush1.xpose.msra.mxu0 %v113
    %147 = vmatprep.subr.mxu0 0.0
    %148 = vmatpush2.xpose.msra.mxu0 0.0
    %149 = vmatprep.subr.mxu0 0.0
    %150 = vmatpush2.xpose.msra.mxu0 0.0
    %151 = vmatprep.subr.mxu0 0.0
    %152 = vmatpush2.xpose.msra.mxu0 0.0
    %153 = vmatprep.subr.mxu0 0.0
    %154 = vmatpush2.xpose.msra.mxu0 0.0
    %155 = vmatprep.subr.mxu0 0.0
    %156 = vmatpush2.xpose.msra.mxu0 0.0
    %157 = vmatprep.subr.mxu0 0.0
    %158 = vmatpush2.xpose.msra.mxu0 0.0
    %159 = vmatprep.subr.mxu0 0.0
    %160 = vmatpush2.xpose.msra.mxu0 0.0
    %161 = vmatprep.subr.mxu0 0.0
    %162 = vmatpush2.xpose.msra.mxu0 0.0
    %163 = vmatprep.subr.mxu0 0.0
    %164 = vmatpush2.xpose.msra.mxu0 0.0
    %165 = vmatprep.subr.mxu0 0.0
    %166 = vmatpush2.xpose.msra.mxu0 0.0
    %167 = vmatprep.subr.mxu0 0.0
    %168 = vmatpush2.xpose.msra.mxu0 0.0
    %169 = vmatprep.subr.mxu0 0.0
    %170 = vmatpush2.xpose.msra.mxu0 0.0
    %171 = vmatprep.subr.mxu0 0.0
    %172 = vmatpush2.xpose.msra.mxu0 0.0
    %173 = vmatprep.subr.mxu0 0.0
    %174 = vmatpush2.xpose.msra.mxu0 0.0
    %175 = vmatprep.subr.mxu0 0.0
    %176 = vmatpush2.xpose.msra.mxu0 0.0
    %177 = vmatprep.subr.mxu0 0.0
    %178 = vmatpush2.xpose.msra.mxu0 0.0
    %179 = vmatprep.mubr.f32.mxu0 0.0
    %180 = vmatmul.mubr.f32.gmra.mxu0 %v89
    %v181 = vpop.f32.mrf.mxu0
    %v182 = vadd.f32 %v50, %v181
    %v183 = vpop.f32.mrf.mxu0
    %184 = vmatprep.mubr.f32.mxu0 0.0
    %185 = vmatmul.mubr.f32.gmra.mxu0 %v92
    %v186 = vpop.f32.mrf.mxu0
    %v187 = vadd.f32 %v55, %v186
    %v188 = vpop.f32.mrf.mxu0
    %189 = vmatprep.mubr.f32.mxu0 0.0
    %190 = vmatmul.mubr.f32.gmra.mxu0 %v95
    %v191 = vpop.f32.mrf.mxu0
    %v192 = vadd.f32 %v60, %v191
    %v193 = vpop.f32.mrf.mxu0
    %194 = vmatprep.mubr.f32.mxu0 0.0
    %195 = vmatmul.mubr.f32.gmra.mxu0 %v98
    %v196 = vpop.f32.mrf.mxu0
    %v197 = vadd.f32 %v65, %v196
    %v198 = vpop.f32.mrf.mxu0
    %199 = vmatprep.mubr.f32.mxu0 0.0
    %200 = vmatmul.mubr.f32.gmra.mxu0 %v101
    %v201 = vpop.f32.mrf.mxu0
    %v202 = vadd.f32 %v70, %v201
    %v203 = vpop.f32.mrf.mxu0
    %204 = vmatprep.mubr.f32.mxu0 0.0
    %205 = vmatmul.mubr.f32.gmra.mxu0 %v104
    %v206 = vpop.f32.mrf.mxu0
    %v207 = vadd.f32 %v75, %v206
    %v208 = vpop.f32.mrf.mxu0
    %209 = vmatprep.mubr.f32.mxu0 0.0
    %210 = vmatmul.mubr.f32.gmra.mxu0 %v107
    %v211 = vpop.f32.mrf.mxu0
    %v212 = vadd.f32 %v80, %v211
    %v213 = vpop.f32.mrf.mxu0
    %214 = vmatprep.mubr.f32.mxu0 0.0
    %215 = vmatmul.mubr.f32.gmra.mxu0 %v110
    %v216 = vpop.f32.mrf.mxu0
    %v217 = vadd.f32 %v85, %v216
    %v218 = vpop.f32.mrf.mxu0
    %219 = vdwg.mxu0
    %v220 = vtanh.pop %v182
    %v221 = vtanh.pop %v187
    %v222 = vtanh.pop %v192
    %v223 = vtanh.pop %v197
    %v224 = vtanh.pop %v202
    %v225 = vtanh.pop %v207
    %v226 = vtanh.pop %v212
    %v227 = vtanh.pop %v217
    %v228 = vld [vmem:[%s4] sm:$0xff]
    %v229 = vld [vmem:[%s4 + $0x8] sm:$0xff]
    %v230 = vld [vmem:[%s4 + $0x10] sm:$0xff]
    %v231 = vld [vmem:[%s4 + $0x18] sm:$0xff]
    %v232 = vld [vmem:[%s4 + $0x20] sm:$0xff]
    %v233 = vld [vmem:[%s4 + $0x28] sm:$0xff]
    %v234 = vld [vmem:[%s4 + $0x30] sm:$0xff]
    %v235 = vld [vmem:[%s4 + $0x38] sm:$0xff]
    %v236 = vld [vmem:[%s5] sm:$0xff]
    %v237 = vld [vmem:[%s5 + $0x8] sm:$0xff]
    %v238 = vld [vmem:[%s5 + $0x10] sm:$0xff]
    %v239 = vld [vmem:[%s5 + $0x18] sm:$0xff]
    %v240 = vld [vmem:[%s5 + $0x20] sm:$0xff]
    %v241 = vld [vmem:[%s5 + $0x28] sm:$0xff]
    %v242 = vld [vmem:[%s5 + $0x30] sm:$0xff]
    %v243 = vld [vmem:[%s5 + $0x38] sm:$0xff]
    %245 = vset.pattern.permute.xlu0 0
    %246 = vperm.xlu0 %245, %v236
    %v247 = vpop.permute.xlu0 %246
    %250 = vset.pattern.permute.xlu0 0
    %251 = vperm.xlu0 %250, %v237
    %v252 = vpop.permute.xlu0 %251
    %255 = vset.pattern.permute.xlu0 0
    %256 = vperm.xlu0 %255, %v238
    %v257 = vpop.permute.xlu0 %256
    %260 = vset.pattern.permute.xlu0 0
    %261 = vperm.xlu0 %260, %v239
    %v262 = vpop.permute.xlu0 %261
    %265 = vset.pattern.permute.xlu0 0
    %266 = vperm.xlu0 %265, %v240
    %v267 = vpop.permute.xlu0 %266
    %270 = vset.pattern.permute.xlu0 0
    %271 = vperm.xlu0 %270, %v241
    %v272 = vpop.permute.xlu0 %271
    %275 = vset.pattern.permute.xlu0 0
    %276 = vperm.xlu0 %275, %v242
    %v277 = vpop.permute.xlu0 %276
    %280 = vset.pattern.permute.xlu0 0
    %281 = vperm.xlu0 %280, %v243
    %v282 = vpop.permute.xlu0 %281
    %vm284 = vcmask 523264
    %v286 = vsel %vm284, %v228, 0
    %v289 = vsel %vm284, %v229, 0
    %v292 = vsel %vm284, %v230, 0
    %v295 = vsel %vm284, %v231, 0
    %v298 = vsel %vm284, %v232, 0
    %v301 = vsel %vm284, %v233, 0
    %v304 = vsel %vm284, %v234, 0
    %v307 = vsel %vm284, %v235, 0
    %309 = vmatprep.subr.mxu0 0.0
    %310 = vmatpush1.msra.mxu0 0.0
    %311 = vmatprep.subr.mxu0 0.0
    %312 = vmatpush1.msra.mxu0 0.0
    %313 = vmatprep.subr.mxu0 0.0
    %314 = vmatpush1.msra.mxu0 0.0
    %315 = vmatprep.subr.mxu0 0.0
    %316 = vmatpush1.msra.mxu0 0.0
    %317 = vmatprep.subr.mxu0 0.0
    %318 = vmatpush1.msra.mxu0 0.0
    %319 = vmatprep.subr.mxu0 0.0
    %320 = vmatpush1.msra.mxu0 0.0
    %321 = vmatprep.subr.mxu0 0.0
    %322 = vmatpush1.msra.mxu0 0.0
    %323 = vmatprep.subr.mxu0 0.0
    %324 = vmatpush1.msra.mxu0 0.0
    %325 = vmatprep.subr.mxu0 0.0
    %326 = vmatpush1.msra.mxu0 %v227
    %327 = vmatprep.subr.mxu0 0.0
    %328 = vmatpush1.msra.mxu0 %v226
    %329 = vmatprep.subr.mxu0 0.0
    %330 = vmatpush1.msra.mxu0 %v225
    %331 = vmatprep.subr.mxu0 0.0
    %332 = vmatpush1.msra.mxu0 %v224
    %333 = vmatprep.subr.mxu0 0.0
    %334 = vmatpush1.msra.mxu0 %v223
    %335 = vmatprep.subr.mxu0 0.0
    %336 = vmatpush1.msra.mxu0 %v222
    %337 = vmatprep.subr.mxu0 0.0
    %338 = vmatpush1.msra.mxu0 %v221
    %339 = vmatprep.subr.mxu0 0.0
    %340 = vmatpush1.msra.mxu0 %v220
    %341 = vmatprep.subr.mxu0 0.0
    %342 = vmatpush2.msra.mxu0 0.0
    %343 = vmatprep.subr.mxu0 0.0
    %344 = vmatpush2.msra.mxu0 0.0
    %345 = vmatprep.subr.mxu0 0.0
    %346 = vmatpush2.msra.mxu0 0.0
    %347 = vmatprep.subr.mxu0 0.0
    %348 = vmatpush2.msra.mxu0 0.0
    %349 = vmatprep.subr.mxu0 0.0
    %350 = vmatpush2.msra.mxu0 0.0
    %351 = vmatprep.subr.mxu0 0.0
    %352 = vmatpush2.msra.mxu0 0.0
    %353 = vmatprep.subr.mxu0 0.0
    %354 = vmatpush2.msra.mxu0 0.0
    %355 = vmatprep.subr.mxu0 0.0
    %356 = vmatpush2.msra.mxu0 0.0
    %357 = vmatprep.subr.mxu0 0.0
    %358 = vmatpush2.msra.mxu0 0.0
    %359 = vmatprep.subr.mxu0 0.0
    %360 = vmatpush2.msra.mxu0 0.0
    %361 = vmatprep.subr.mxu0 0.0
    %362 = vmatpush2.msra.mxu0 0.0
    %363 = vmatprep.subr.mxu0 0.0
    %364 = vmatpush2.msra.mxu0 0.0
    %365 = vmatprep.subr.mxu0 0.0
    %366 = vmatpush2.msra.mxu0 0.0
    %367 = vmatprep.subr.mxu0 0.0
    %368 = vmatpush2.msra.mxu0 0.0
    %369 = vmatprep.subr.mxu0 0.0
    %370 = vmatpush2.msra.mxu0 0.0
    %371 = vmatprep.subr.mxu0 0.0
    %372 = vmatpush2.msra.mxu0 0.0
    %373 = vmatprep.mubr.f32.mxu0 0.0
    %374 = vmatmul.mubr.f32.gmra.mxu0 %v286
    %v375 = vpop.f32.mrf.mxu0
    %v376 = vadd.f32 %v247, %v375
    %v377 = vpop.f32.mrf.mxu0
    %378 = vmatprep.mubr.f32.mxu0 0.0
    %379 = vmatmul.mubr.f32.gmra.mxu0 %v289
    %v380 = vpop.f32.mrf.mxu0
    %v381 = vadd.f32 %v252, %v380
    %v382 = vpop.f32.mrf.mxu0
    %383 = vmatprep.mubr.f32.mxu0 0.0
    %384 = vmatmul.mubr.f32.gmra.mxu0 %v292
    %v385 = vpop.f32.mrf.mxu0
    %v386 = vadd.f32 %v257, %v385
    %v387 = vpop.f32.mrf.mxu0
    %388 = vmatprep.mubr.f32.mxu0 0.0
    %389 = vmatmul.mubr.f32.gmra.mxu0 %v295
    %v390 = vpop.f32.mrf.mxu0
    %v391 = vadd.f32 %v262, %v390
    %v392 = vpop.f32.mrf.mxu0
    %393 = vmatprep.mubr.f32.mxu0 0.0
    %394 = vmatmul.mubr.f32.gmra.mxu0 %v298
    %v395 = vpop.f32.mrf.mxu0
    %v396 = vadd.f32 %v267, %v395
    %v397 = vpop.f32.mrf.mxu0
    %398 = vmatprep.mubr.f32.mxu0 0.0
    %399 = vmatmul.mubr.f32.gmra.mxu0 %v301
    %v400 = vpop.f32.mrf.mxu0
    %v401 = vadd.f32 %v272, %v400
    %v402 = vpop.f32.mrf.mxu0
    %403 = vmatprep.mubr.f32.mxu0 0.0
    %404 = vmatmul.mubr.f32.gmra.mxu0 %v304
    %v405 = vpop.f32.mrf.mxu0
    %v406 = vadd.f32 %v277, %v405
    %v407 = vpop.f32.mrf.mxu0
    %408 = vmatprep.mubr.f32.mxu0 0.0
    %409 = vmatmul.mubr.f32.gmra.mxu0 %v307
    %v410 = vpop.f32.mrf.mxu0
    %v411 = vadd.f32 %v282, %v410
    %v412 = vpop.f32.mrf.mxu0
    %413 = vdwg.mxu0
    %v414 = vtanh.pop %v376
    %v415 = vtanh.pop %v381
    %v416 = vtanh.pop %v386
    %v417 = vtanh.pop %v391
    %v418 = vtanh.pop %v396
    %v419 = vtanh.pop %v401
    %v420 = vtanh.pop %v406
    %v421 = vtanh.pop %v411
    %v422 = vld [vmem:[%s6] sm:$0x1f]
    %v423 = vld [vmem:[%s7] sm:$0x1f]
    %425 = vset.pattern.permute.xlu0 0
    %426 = vperm.xlu0 %425, %v423
    %v427 = vpop.permute.xlu0 %426
    %v430 = vsel %vm284, %v422, 0
    %432 = vmatprep.subr.mxu0 0.0
    %433 = vmatpush1.msra.mxu0 0.0
    %434 = vmatprep.subr.mxu0 0.0
    %435 = vmatpush1.msra.mxu0 0.0
    %436 = vmatprep.subr.mxu0 0.0
    %437 = vmatpush1.msra.mxu0 0.0
    %438 = vmatprep.subr.mxu0 0.0
    %439 = vmatpush1.msra.mxu0 0.0
    %440 = vmatprep.subr.mxu0 0.0
    %441 = vmatpush1.msra.mxu0 0.0
    %442 = vmatprep.subr.mxu0 0.0
    %443 = vmatpush1.msra.mxu0 0.0
    %444 = vmatprep.subr.mxu0 0.0
    %445 = vmatpush1.msra.mxu0 0.0
    %446 = vmatprep.subr.mxu0 0.0
    %447 = vmatpush1.msra.mxu0 0.0
    %448 = vmatprep.subr.mxu0 0.0
    %449 = vmatpush1.msra.mxu0 %v421
    %450 = vmatprep.subr.mxu0 0.0
    %451 = vmatpush1.msra.mxu0 %v420
    %452 = vmatprep.subr.mxu0 0.0
    %453 = vmatpush1.msra.mxu0 %v419
    %454 = vmatprep.subr.mxu0 0.0
    %455 = vmatpush1.msra.mxu0 %v418
    %456 = vmatprep.subr.mxu0 0.0
    %457 = vmatpush1.msra.mxu0 %v417
    %458 = vmatprep.subr.mxu0 0.0
    %459 = vmatpush1.msra.mxu0 %v416
    %460 = vmatprep.subr.mxu0 0.0
    %461 = vmatpush1.msra.mxu0 %v415
    %462 = vmatprep.subr.mxu0 0.0
    %463 = vmatpush1.msra.mxu0 %v414
    %464 = vmatprep.subr.mxu0 0.0
    %465 = vmatpush2.msra.mxu0 0.0
    %466 = vmatprep.subr.mxu0 0.0
    %467 = vmatpush2.msra.mxu0 0.0
    %468 = vmatprep.subr.mxu0 0.0
    %469 = vmatpush2.msra.mxu0 0.0
    %470 = vmatprep.subr.mxu0 0.0
    %471 = vmatpush2.msra.mxu0 0.0
    %472 = vmatprep.subr.mxu0 0.0
    %473 = vmatpush2.msra.mxu0 0.0
    %474 = vmatprep.subr.mxu0 0.0
    %475 = vmatpush2.msra.mxu0 0.0
    %476 = vmatprep.subr.mxu0 0.0
    %477 = vmatpush2.msra.mxu0 0.0
    %478 = vmatprep.subr.mxu0 0.0
    %479 = vmatpush2.msra.mxu0 0.0
    %480 = vmatprep.subr.mxu0 0.0
    %481 = vmatpush2.msra.mxu0 0.0
    %482 = vmatprep.subr.mxu0 0.0
    %483 = vmatpush2.msra.mxu0 0.0
    %484 = vmatprep.subr.mxu0 0.0
    %485 = vmatpush2.msra.mxu0 0.0
    %486 = vmatprep.subr.mxu0 0.0
    %487 = vmatpush2.msra.mxu0 0.0
    %488 = vmatprep.subr.mxu0 0.0
    %489 = vmatpush2.msra.mxu0 0.0
    %490 = vmatprep.subr.mxu0 0.0
    %491 = vmatpush2.msra.mxu0 0.0
    %492 = vmatprep.subr.mxu0 0.0
    %493 = vmatpush2.msra.mxu0 0.0
    %494 = vmatprep.subr.mxu0 0.0
    %495 = vmatpush2.msra.mxu0 0.0
    %496 = vmatprep.mubr.f32.mxu0 0.0
    %497 = vmatmul.mubr.f32.gmra.mxu0 %v430
    %v498 = vpop.f32.mrf.mxu0
    %v499 = vadd.f32 %v427, %v498
    %v500 = vpop.f32.mrf.mxu0
    %501 = vdwg.mxu0
    %vm502 = vcmask 60416
    %v503 = vsel %vm502, %v499, -inf
    %v504 = vrot.slane %v503, 4
    %v505 = vmax.f32 %v503, %v504
    %v506 = vrot.slane %v505, 2
    %v507 = vmax.f32 %v505, %v506
    %v508 = vrot.slane %v507, 1
    %v509 = vmax.f32 %v507, %v508
    %v510 = vsub.f32 %v499, %v509
    %v511 = vmul.f32 %v510, 1.442695
    %v512 = vpow.pop %v511
    %v513 = vsel %vm502, %v512, 0.0
    %v514 = vrot.slane %v513, 4
    %v515 = vadd.f32 %v513, %v514
    %v516 = vrot.slane %v515, 2
    %v517 = vadd.f32 %v515, %v516
    %v518 = vrot.slane %v517, 1
    %v519 = vadd.f32 %v517, %v518
    %v520 = vlog2.pop %v519
    %v521 = vmul.f32 %v520, 0.6931472
    %v522 = vsub.f32 %v510, %v521
    %v523 = vmul.f32 %v522, 1.442695
    %v524 = vpow.pop %v523
    %v525 = vld [vmem:[%s1] sm:$0x1]
    %v526 = vlaneseq
    %v527 = vshrl.u32 %v526, 7
    %v528 = vlaneseq
    %v529 = vshrl.u32 %v528, 7
    %v530 = vsub.s32 0, %v529
    %v531 = vrot.slane %v525, %v530
    %vm532 = vcmp.eq.s32.totalorder %v527, %v531
    %v533 = vsel %vm532, 1, 0
    %v534 = vcvt.s32.f32 %v533
    %v535 = vmul.f32 %v534, %v522
    %v536 = vsel %vm502, %v535, 0.0
    %v537 = vrot.slane %v536, 4
    %v538 = vadd.f32 %v536, %v537
    %v539 = vrot.slane %v538, 2
    %v540 = vadd.f32 %v538, %v539
    %v541 = vrot.slane %v540, 1
    %v542 = vadd.f32 %v540, %v541
    %vm543 = vcmask 57344
    %544 = vst.msk [vmem:[#allocation2] sm:$0x1] %vm543, %v542
    %vm545 = vcmask 61444
    %546 = vst.msk [vmem:[#allocation2 - $0x3] sm:$0x10] %vm545, %v499
    %v547 = vmul.f32 %v524, %v522
    %v548 = vsel %vm502, %v547, 0.0
    %v549 = vrot.slane %v548, 4
    %v550 = vadd.f32 %v548, %v549
    %v551 = vrot.slane %v550, 2
    %v552 = vadd.f32 %v550, %v551
    %v553 = vrot.slane %v552, 1
    %v554 = vadd.f32 %v552, %v553
    %v555 = vsub.f32 0.0, %v554
    %556 = vst.msk [vmem:[#allocation2 + $0x2] sm:$0x1] %vm543, %v555
    // Predicated region
    $region34: #{tpu_custom_call.1} parent=1 // pred_check
      _
    $region35: #{tpu_custom_call.1} parent=1 // pred_check_branch
      %558 = sbr.rel (0) target = $region37
    $region36: #{tpu_custom_call.1} parent=1 // pred_region
      %s560 = ssub.s32 64, 64
      %561 = vsyncadd [#allocation3], %s560
      %s563 = sshll.u32 [#allocation2], 4
      %s564 = int_to_ptr.vmem [resolvable:$true] %s563
      %566 = dma.vmem_to_hbm [thread:$0]  %s564, 64, %s8, [#allocation3]
    $region37: #{tpu_custom_call.1} parent=1 // pred_fallthru
      _
    // Predicated region
    $region38: #{tpu_custom_call.1} parent=1 // pred_check
      _
    $region39: #{tpu_custom_call.1} parent=1 // pred_check_branch
      %568 = sbr.rel (0) target = $region41
    $region40: #{tpu_custom_call.1} parent=1 // pred_region
      %569 = dma.done [#allocation3], 64
    $region41: #{tpu_custom_call.1} parent=1 // pred_fallthru
      _
    %570 = vsyncpa [#allocation3], 1

</llo_original>
